<compile_context>
chip_gen: v7x
topology: tpu7x:2x2x1
jax: 0.10.0
libtpu: 0.0.40
codegen_flags: <defaults>
</compile_context>

<pallas_src>
import numpy as np
import jax
import jax.numpy as jnp
from jax.experimental import pallas as pl
from jax.experimental.pallas import tpu as pltpu


# ----------------------------------------------------------------------------
# Host-side physics precompute (deterministic parameter setup, numpy float64)
# ----------------------------------------------------------------------------
def _ring_denom_sq(center_wl, wavelengths, radius, kappa, q_factor):
    n_group = 4.2
    fsr = center_wl ** 2 / (n_group * 2.0 * np.pi * radius)
    phi = 2.0 * np.pi * (wavelengths - center_wl) / fsr
    kappa = np.clip(kappa, 0.1, 0.9)
    t = np.sqrt(1.0 - kappa ** 2)
    alpha = 1.0 - np.pi / q_factor
    denom_sq = (1.0 - alpha * t * np.cos(phi)) ** 2 + (alpha * t * np.sin(phi)) ** 2
    return phi, kappa, t, alpha, denom_sq


def ring_drop_transmission(center_wl, wavelengths, radius, kappa, q_factor):
    _, kappa, _, alpha, denom_sq = _ring_denom_sq(center_wl, wavelengths, radius, kappa, q_factor)
    return (kappa ** 2) * alpha / denom_sq


def ring_through_transmission(center_wl, wavelengths, radius, kappa, q_factor):
    phi, _, t, alpha, denom_sq = _ring_denom_sq(center_wl, wavelengths, radius, kappa, q_factor)
    num = (t - alpha * np.cos(phi)) ** 2 + (alpha * np.sin(phi)) ** 2
    return num / denom_sq


def weight_bank_drop_matrix(n_in, n_out, wavelengths,
                            wl_range=(1.53e-6, 1.57e-6),
                            radius=5e-6, kappa=0.5, q_factor=15000):
    """MRRWeightBank: output[b,o,w] = sum_j input[b,j,w] * drop_{o,j}[w].

    Returned (float64) as D[w, j, o] so input_w @ D[w] implements the bank."""
    wl_min, wl_max = wl_range
    nwl = len(wavelengths)
    D = np.zeros((nwl, n_in, n_out), dtype=np.float64)
    for i in range(n_out):
        for j in range(n_in):
            c = wl_min + (wl_max - wl_min) * (i * n_in + j) / (n_in * n_out)
            D[:, j, i] = ring_drop_transmission(c, wavelengths, radius, kappa, q_factor)
    return D


# ----------------------------------------------------------------------------
# Pallas kernel wrapper: 1 folded optical matmul + photodetection + MLP head
# ----------------------------------------------------------------------------
def _pick_block_b(B):
    # Small batches: one fat grid step (amortize ~0.35us/step fixed overhead).
    if B <= 256:
        return B
    # Large batches: biggest divisor <= min(4096, B//2) so v7x's two TensorCores both get
    # work (grid length >= 2) while steps stay fat. VMEM per block is tiny either way.
    cap = min(4096, B // 2)
    for cand in (4096, 2048, 1024, 512, 256, 128):
        if cand <= cap and B % cand == 0:
            return cand
    return B


def hybrid_photonic_forward(x, params):
    B, in_size = x.shape
    dt = params["dt"]           # [merged, in_size]  folded optical path (transposed)
    w1t = params["w1t"]         # [elec_h, opt_h]
    b1t = params["b1t"]         # [elec_h, 1]
    w2tp = params["w2tp"]       # [out_pad, elec_h]  rows out_size..out_pad-1 are zero
    b2tp = params["b2tp"]       # [out_pad, 1]
    out_size = int(params["out_size"])
    dark = float(params["dark_current"])

    merged = dt.shape[0]
    elec_h, opt_h = w1t.shape
    out_pad = w2tp.shape[0]
    nwl_kept = merged // opt_h
    f_slab = opt_h + out_pad            # 24 sublane rows: [optical | final(padded)]

    block_b = _pick_block_b(B)
    grid = (B // block_b,)

    xt = x.T                            # [in_size, B]: batch on the lane (minor) axis

    def kernel(xt_ref, d_ref, w1_ref, b1_ref, w2_ref, b2_ref, out_ref):
        # Optical path: single folded, lane-dense MXU matmul (N = block_b).
        h = jnp.dot(d_ref[...], xt_ref[...], preferred_element_type=jnp.float32)   # [merged, bb]
        # Photodetection: |.|^2 summed over wavelength sublane-blocks (vreg-granular adds).
        sq = h * h
        psum = sq[0:opt_h, :]
        for w in range(1, nwl_kept):
            psum = psum + sq[w * opt_h:(w + 1) * opt_h, :]
        optical = jnp.float32(0.8) * psum + jnp.float32(dark)                       # [opt_h, bb]
        # Electronic head: Linear -> ReLU -> (Dropout: identity in eval) -> Linear (padded rows).
        z = jnp.dot(w1_ref[...], optical, preferred_element_type=jnp.float32) + b1_ref[...]
        z = jnp.maximum(z, jnp.float32(0.0))
        final = jnp.dot(w2_ref[...], z, preferred_element_type=jnp.float32) + b2_ref[...]  # [out_pad, bb]
        # Two sublane-aligned, full-lane-width stores; no concat, no fill materialization.
        out_ref[0:opt_h, :] = optical
        out_ref[opt_h:f_slab, :] = final

    flops = 2 * B * (in_size * merged + opt_h * elec_h + elec_h * out_pad) + 3 * B * merged
    bytes_accessed = 4 * (x.size + dt.size + w1t.size + b1t.size + w2tp.size + b2tp.size
                          + B * f_slab)

    slab = pl.pallas_call(
        kernel,
        out_shape=jax.ShapeDtypeStruct((f_slab, B), jnp.float32),
        grid=grid,
        in_specs=[
            pl.BlockSpec((in_size, block_b), lambda i: (0, i)),   # X^T: tiled over batch lanes
            pl.BlockSpec((merged, in_size), lambda i: (0, 0)),    # folded optical matrix (resident)
            pl.BlockSpec((elec_h, opt_h), lambda i: (0, 0)),      # W1 (as [elec_h, opt_h])
            pl.BlockSpec((elec_h, 1), lambda i: (0, 0)),          # b1
            pl.BlockSpec((out_pad, elec_h), lambda i: (0, 0)),    # W2 (padded)
            pl.BlockSpec((out_pad, 1), lambda i: (0, 0)),         # b2 (padded)
        ],
        out_specs=pl.BlockSpec((f_slab, block_b), lambda i: (0, i)),
        compiler_params=pltpu.CompilerParams(dimension_semantics=("parallel",)),
        cost_estimate=pl.CostEstimate(flops=flops, transcendentals=0,
                                      bytes_accessed=bytes_accessed),
    )(xt, dt, w1t, b1t, w2tp, b2tp)

    optical_out = slab[:opt_h, :].T                       # [B, opt_h]
    final_out = slab[opt_h:opt_h + out_size, :].T         # [B, out_size]
    return optical_out, final_out


# ----------------------------------------------------------------------------
if __name__ == "__main__":
    # HybridPhotonicSystem(input_size=32, optical_hidden_size=16,
    #                      electronic_hidden_size=8, output_size=4), n_wavelengths=4
    INPUT_SIZE, OPT_H, ELEC_H, OUT_SIZE, NWL = 32, 16, 8, 4, 4
    OUT_PAD = 8
    B = 2

    wavelengths = np.linspace(1.53e-6, 1.57e-6, NWL)

    # Input wavelength encoding: x[:, i] * (0.5 + 0.5*sin(2*pi*j/NWL))   (float64)
    enc = 0.5 + 0.5 * np.sin(2.0 * np.pi * np.arange(NWL) / NWL)

    # Activation microring (through port): radius=1e-5, center=1.55um, kappa=0.7, Q=5000
    t_act = ring_through_transmission(1.55e-6, wavelengths, 1e-5, 0.7, 5000)

    # MRR weight banks (drop-port transmissions), float64 until the final cast.
    d0 = weight_bank_drop_matrix(INPUT_SIZE, OPT_H, wavelengths)   # [NWL, 32, 16]
    d1 = weight_bank_drop_matrix(OPT_H, OPT_H, wavelengths)        # [NWL, 16, 16]

    # Prune wavelength channels with negligible encoding (|enc| <= 1e-12): their
    # post-photodetection contribution (~1e-33) is far below the 4e-9 dark current.
    keep = np.nonzero(np.abs(enc) > 1e-12)[0]

    # Fold encoding + bank0 + activation ring + bank1 per wavelength; stack (transposed)
    # along the sublane axis: Dt[w*16:(w+1)*16, :] = (enc[w]*t_act[w] * (d0[w] @ d1[w])).T
    Dt = np.concatenate(
        [(enc[w] * t_act[w] * (d0[w] @ d1[w])).T for w in keep], axis=0
    ).astype(np.float32)                                           # [len(keep)*16, 32]

    # Electronic processor params (deterministic PyTorch-Linear-style uniform init),
    # stored transposed for the batch-in-lanes layout; W2/b2 zero-padded to 8 rows.
    key = jax.random.PRNGKey(0)
    k1, k2, k3, k4, k5 = jax.random.split(key, 5)
    lim1 = 1.0 / np.sqrt(OPT_H)
    lim2 = 1.0 / np.sqrt(ELEC_H)
    w1t = jax.random.uniform(k1, (ELEC_H, OPT_H), jnp.float32, -lim1, lim1)
    b1t = jax.random.uniform(k2, (ELEC_H, 1), jnp.float32, -lim1, lim1)
    w2t = jax.random.uniform(k3, (OUT_SIZE, ELEC_H), jnp.float32, -lim2, lim2)
    b2t = jax.random.uniform(k4, (OUT_SIZE, 1), jnp.float32, -lim2, lim2)
    w2tp = jnp.zeros((OUT_PAD, ELEC_H), jnp.float32).at[:OUT_SIZE].set(w2t)
    b2tp = jnp.zeros((OUT_PAD, 1), jnp.float32).at[:OUT_SIZE].set(b2t)

    x = jax.random.normal(k5, (B, INPUT_SIZE), dtype=jnp.float32)

    params = dict(
        dt=jnp.asarray(Dt), w1t=w1t, b1t=b1t, w2tp=w2tp, b2tp=b2tp,
        out_size=OUT_SIZE,
        dark_current=NWL * 1e-9,   # per-wavelength dark current summed by the detector
    )

    optical_out, final_out = hybrid_photonic_forward(x, params)
    jax.block_until_ready((optical_out, final_out))

    assert optical_out.shape == (B, OPT_H) and optical_out.dtype == jnp.float32
    assert final_out.shape == (B, OUT_SIZE) and final_out.dtype == jnp.float32
    print("KERNEL_OK")
</pallas_src>

<mosaic_0001>
module attributes {stable_mosaic.version = 11 : i64} {
  func.func @kernel(%arg0: i32, %arg1: memref<32x2xf32, #tpu.memory_space<vmem>>, %arg2: memref<48x32xf32, #tpu.memory_space<vmem>>, %arg3: memref<8x16xf32, #tpu.memory_space<vmem>>, %arg4: memref<8x1xf32, #tpu.memory_space<vmem>>, %arg5: memref<8x8xf32, #tpu.memory_space<vmem>>, %arg6: memref<8x1xf32, #tpu.memory_space<vmem>>, %arg7: memref<24x2xf32, #tpu.memory_space<vmem>>) attributes {dimension_semantics = [#tpu.dimension_semantics<parallel>], iteration_bounds = array<i64: 1>, scalar_prefetch = 0 : i64, scratch_operands = 0 : i64, tpu.core_type = #tpu.core_type<tc>, window_params = [{transform_indices = @transform_0, window_bounds = array<i64: 32, 2>}, {pipeline_mode = #tpu.pipeline_mode<synchronous>, transform_indices = @transform_1, window_bounds = array<i64: 48, 32>}, {pipeline_mode = #tpu.pipeline_mode<synchronous>, transform_indices = @transform_2, window_bounds = array<i64: 8, 16>}, {pipeline_mode = #tpu.pipeline_mode<synchronous>, transform_indices = @transform_3, window_bounds = array<i64: 8, 1>}, {pipeline_mode = #tpu.pipeline_mode<synchronous>, transform_indices = @transform_4, window_bounds = array<i64: 8, 8>}, {pipeline_mode = #tpu.pipeline_mode<synchronous>, transform_indices = @transform_5, window_bounds = array<i64: 8, 1>}, {transform_indices = @transform_6, window_bounds = array<i64: 24, 2>}]} {
    %c0 = arith.constant 0 : index
    %c0_0 = arith.constant 0 : index
    %0 = vector.load %arg2[%c0, %c0_0] : memref<48x32xf32, #tpu.memory_space<vmem>>, vector<48x32xf32>
    %c0_1 = arith.constant 0 : index
    %c0_2 = arith.constant 0 : index
    %1 = vector.load %arg1[%c0_1, %c0_2] : memref<32x2xf32, #tpu.memory_space<vmem>>, vector<32x2xf32>
    %cst = arith.constant dense<0.000000e+00> : vector<48x2xf32>
    %2 = tpu.matmul %0, %1, %cst {dimension_numbers = #tpu.dot_dimension_numbers<[1], [0], [0], [1], [0, 0, 1, 1], [], []>} : vector<48x32xf32>, vector<32x2xf32>, vector<48x2xf32> -> vector<48x2xf32>
    %3 = arith.mulf %2, %2 : vector<48x2xf32>
    %4 = vector.extract_strided_slice %3 {offsets = [0, 0], sizes = [16, 2], strides = [1, 1]} : vector<48x2xf32> to vector<16x2xf32>
    %5 = vector.extract_strided_slice %3 {offsets = [16, 0], sizes = [16, 2], strides = [1, 1]} : vector<48x2xf32> to vector<16x2xf32>
    %6 = arith.addf %4, %5 : vector<16x2xf32>
    %7 = vector.extract_strided_slice %3 {offsets = [32, 0], sizes = [16, 2], strides = [1, 1]} : vector<48x2xf32> to vector<16x2xf32>
    %8 = arith.addf %6, %7 : vector<16x2xf32>
    %cst_3 = arith.constant 8.000000e-01 : f32
    %9 = vector.broadcast %cst_3 : f32 to vector<16x2xf32>
    %10 = arith.mulf %9, %8 : vector<16x2xf32>
    %cst_4 = arith.constant 4.000000e-09 : f32
    %11 = vector.broadcast %cst_4 : f32 to vector<16x2xf32>
    %12 = arith.addf %10, %11 : vector<16x2xf32>
    %c0_5 = arith.constant 0 : index
    %c0_6 = arith.constant 0 : index
    %13 = vector.load %arg3[%c0_5, %c0_6] : memref<8x16xf32, #tpu.memory_space<vmem>>, vector<8x16xf32>
    %cst_7 = arith.constant dense<0.000000e+00> : vector<8x2xf32>
    %14 = tpu.matmul %13, %12, %cst_7 {dimension_numbers = #tpu.dot_dimension_numbers<[1], [0], [0], [1], [0, 0, 1, 1], [], []>} : vector<8x16xf32>, vector<16x2xf32>, vector<8x2xf32> -> vector<8x2xf32>
    %c0_8 = arith.constant 0 : index
    %c0_9 = arith.constant 0 : index
    %15 = vector.load %arg4[%c0_8, %c0_9] : memref<8x1xf32, #tpu.memory_space<vmem>>, vector<8x1xf32>
    %16 = vector.broadcast %15 : vector<8x1xf32> to vector<8x2xf32>
    %17 = arith.addf %14, %16 : vector<8x2xf32>
    %cst_10 = arith.constant 0.000000e+00 : f32
    %18 = vector.broadcast %cst_10 : f32 to vector<8x2xf32>
    %19 = arith.maximumf %17, %18 : vector<8x2xf32>
    %c0_11 = arith.constant 0 : index
    %c0_12 = arith.constant 0 : index
    %20 = vector.load %arg5[%c0_11, %c0_12] : memref<8x8xf32, #tpu.memory_space<vmem>>, vector<8x8xf32>
    %cst_13 = arith.constant dense<0.000000e+00> : vector<8x2xf32>
    %21 = tpu.matmul %20, %19, %cst_13 {dimension_numbers = #tpu.dot_dimension_numbers<[1], [0], [0], [1], [0, 0, 1, 1], [], []>} : vector<8x8xf32>, vector<8x2xf32>, vector<8x2xf32> -> vector<8x2xf32>
    %c0_14 = arith.constant 0 : index
    %c0_15 = arith.constant 0 : index
    %22 = vector.load %arg6[%c0_14, %c0_15] : memref<8x1xf32, #tpu.memory_space<vmem>>, vector<8x1xf32>
    %23 = vector.broadcast %22 : vector<8x1xf32> to vector<8x2xf32>
    %24 = arith.addf %21, %23 : vector<8x2xf32>
    %c0_16 = arith.constant 0 : index
    %c0_17 = arith.constant 0 : index
    %25 = vector.load %arg7[%c0_16, %c0_17] : memref<24x2xf32, #tpu.memory_space<vmem>>, vector<16x2xf32>
    tpu.vector_store %arg7[%c0_16, %c0_17], %12 {strides = array<i32>} : memref<24x2xf32, #tpu.memory_space<vmem>>, vector<16x2xf32>,
    %c16 = arith.constant 16 : index
    %c0_18 = arith.constant 0 : index
    %26 = vector.load %arg7[%c16, %c0_18] : memref<24x2xf32, #tpu.memory_space<vmem>>, vector<8x2xf32>
    tpu.vector_store %arg7[%c16, %c0_18], %24 {strides = array<i32>} : memref<24x2xf32, #tpu.memory_space<vmem>>, vector<8x2xf32>,
    return
  }
  func.func @transform_0(%arg0: i32) -> (i32, i32) {
    %c0_i32 = arith.constant 0 : i32
    %c0_i32_0 = arith.constant 0 : i32
    return %c0_i32, %arg0 : i32, i32
  }
  func.func @transform_1(%arg0: i32) -> (i32, i32) {
    %c0_i32 = arith.constant 0 : i32
    %c0_i32_0 = arith.constant 0 : i32
    %c0_i32_1 = arith.constant 0 : i32
    return %c0_i32, %c0_i32_0 : i32, i32
  }
  func.func @transform_2(%arg0: i32) -> (i32, i32) {
    %c0_i32 = arith.constant 0 : i32
    %c0_i32_0 = arith.constant 0 : i32
    %c0_i32_1 = arith.constant 0 : i32
    return %c0_i32, %c0_i32_0 : i32, i32
  }
  func.func @transform_3(%arg0: i32) -> (i32, i32) {
    %c0_i32 = arith.constant 0 : i32
    %c0_i32_0 = arith.constant 0 : i32
    %c0_i32_1 = arith.constant 0 : i32
    return %c0_i32, %c0_i32_0 : i32, i32
  }
  func.func @transform_4(%arg0: i32) -> (i32, i32) {
    %c0_i32 = arith.constant 0 : i32
    %c0_i32_0 = arith.constant 0 : i32
    %c0_i32_1 = arith.constant 0 : i32
    return %c0_i32, %c0_i32_0 : i32, i32
  }
  func.func @transform_5(%arg0: i32) -> (i32, i32) {
    %c0_i32 = arith.constant 0 : i32
    %c0_i32_0 = arith.constant 0 : i32
    %c0_i32_1 = arith.constant 0 : i32
    return %c0_i32, %c0_i32_0 : i32, i32
  }
  func.func @transform_6(%arg0: i32) -> (i32, i32) {
    %c0_i32 = arith.constant 0 : i32
    %c0_i32_0 = arith.constant 0 : i32
    return %c0_i32, %arg0 : i32, i32
  }
}

</mosaic_0001>

<llo_original>
// kernel: tpu_custom_call.1
$region0: #{tpu_custom_call.1}
  #allocation0 [shape = 'u32[]', space=smem, size = 0x4, offset = 0x4, fixed_abs, tag = 'smem constant byte address 0x4 - core index']
  #allocation1 [shape = 'u32[144,128]{1,0:T(1,128)}', space=vmem, size = 0x12000, scoped, tag = 'internal scratch']
  %s0 = inlined_call_operand.vmem [shape: f32[32,2], index: 0, kind: input, shape index: {}]
  %s1 = inlined_call_operand.vmem [shape: f32[48,32], index: 1, kind: input, shape index: {}]
  %s2 = inlined_call_operand.vmem [shape: f32[8,16], index: 2, kind: input, shape index: {}]
  %s3 = inlined_call_operand.vmem [shape: f32[8,1], index: 3, kind: input, shape index: {}]
  %s4 = inlined_call_operand.vmem [shape: f32[8,8], index: 4, kind: input, shape index: {}]
  %s5 = inlined_call_operand.vmem [shape: f32[8,1], index: 5, kind: input, shape index: {}]
  %s6 = inlined_call_operand.vmem [shape: f32[24,2], index: 6, kind: output, shape index: {}]
  %s7 = sld [smem:[#allocation0]]
  $region34: #{tpu_custom_call.1} parent=0
    _
  %s9 = ssub.s32 1, %s7
  %s10 = scalar_select 0, %s9, %s7
  // Predicated region
  $region2: #{tpu_custom_call.1} parent=0 // pred_check
    _
  $region3: #{tpu_custom_call.1} parent=0 // pred_check_branch
    %12 = sbr.rel (0) target = $region5
  $region4: #{tpu_custom_call.1} parent=0 // pred_region
    _
  $region5: #{tpu_custom_call.1} parent=0 // pred_fallthru
    _
  // Predicated region
  $region6: #{tpu_custom_call.1} parent=0 // pred_check
    _
  $region7: #{tpu_custom_call.1} parent=0 // pred_check_branch
    %14 = sbr.rel (0) target = $region9
  $region8: #{tpu_custom_call.1} parent=0 // pred_region
    _
  $region9: #{tpu_custom_call.1} parent=0 // pred_fallthru
    _
  // Predicated region
  $region10: #{tpu_custom_call.1} parent=0 // pred_check
    _
  $region11: #{tpu_custom_call.1} parent=0 // pred_check_branch
    %16 = sbr.rel (0) target = $region13
  $region12: #{tpu_custom_call.1} parent=0 // pred_region
    _
  $region13: #{tpu_custom_call.1} parent=0 // pred_fallthru
    _
  // Predicated region
  $region14: #{tpu_custom_call.1} parent=0 // pred_check
    _
  $region15: #{tpu_custom_call.1} parent=0 // pred_check_branch
    %18 = sbr.rel (0) target = $region17
  $region16: #{tpu_custom_call.1} parent=0 // pred_region
    _
  $region17: #{tpu_custom_call.1} parent=0 // pred_fallthru
    _
  // Predicated region
  $region18: #{tpu_custom_call.1} parent=0 // pred_check
    _
  $region19: #{tpu_custom_call.1} parent=0 // pred_check_branch
    %20 = sbr.rel (0) target = $region21
  $region20: #{tpu_custom_call.1} parent=0 // pred_region
    _
  $region21: #{tpu_custom_call.1} parent=0 // pred_fallthru
    _
  // Predicated region
  $region22: #{tpu_custom_call.1} parent=0 // pred_check
    _
  $region23: #{tpu_custom_call.1} parent=0 // pred_check_branch
    %22 = sbr.rel (0) target = $region25
  $region24: #{tpu_custom_call.1} parent=0 // pred_region
    _
  $region25: #{tpu_custom_call.1} parent=0 // pred_fallthru
    _
  %v23 = vld [vmem:[%s1] sm:$0xff]
  %v24 = vld [vmem:[%s1 + $0x8] sm:$0xff]
  %v25 = vld [vmem:[%s1 + $0x10] sm:$0xff]
  %v26 = vld [vmem:[%s1 + $0x18] sm:$0xff]
  %v27 = vld [vmem:[%s1 + $0x20] sm:$0xff]
  %v28 = vld [vmem:[%s1 + $0x28] sm:$0xff]
  %v29 = vld [vmem:[%s0] sm:$0xff]
  %v30 = vld [vmem:[%s0 + $0x8] sm:$0xff]
  %v31 = vld [vmem:[%s0 + $0x10] sm:$0xff]
  %v32 = vld [vmem:[%s0 + $0x18] sm:$0xff]
  %vm33 = vcmask 261120
  %v35 = vsel %vm33, %v23, 0
  %v38 = vsel %vm33, %v24, 0
  %v41 = vsel %vm33, %v25, 0
  %v44 = vsel %vm33, %v26, 0
  %v47 = vsel %vm33, %v27, 0
  %v50 = vsel %vm33, %v28, 0
  %52 = vmatprep.subr.mxu0 0.0
  %53 = vmatpush1.msra.mxu0 %v29
  %54 = vmatprep.subr.mxu0 0.0
  %55 = vmatpush1.msra.mxu0 %v30
  %56 = vmatprep.subr.mxu0 0.0
  %57 = vmatpush1.msra.mxu0 %v31
  %58 = vmatprep.subr.mxu0 0.0
  %59 = vmatpush1.msra.mxu0 %v32
  %60 = vmatprep.subr.mxu0 0.0
  %61 = vmatpush1.msra.mxu0 0.0
  %62 = vmatprep.subr.mxu0 0.0
  %63 = vmatpush1.msra.mxu0 0.0
  %64 = vmatprep.subr.mxu0 0.0
  %65 = vmatpush1.msra.mxu0 0.0
  %66 = vmatprep.subr.mxu0 0.0
  %67 = vmatpush1.msra.mxu0 0.0
  %68 = vmatprep.subr.mxu0 0.0
  %69 = vmatpush1.msra.mxu0 0.0
  %70 = vmatprep.subr.mxu0 0.0
  %71 = vmatpush1.msra.mxu0 0.0
  %72 = vmatprep.subr.mxu0 0.0
  %73 = vmatpush1.msra.mxu0 0.0
  %74 = vmatprep.subr.mxu0 0.0
  %75 = vmatpush1.msra.mxu0 0.0
  %76 = vmatprep.subr.mxu0 0.0
  %77 = vmatpush1.msra.mxu0 0.0
  %78 = vmatprep.subr.mxu0 0.0
  %79 = vmatpush1.msra.mxu0 0.0
  %80 = vmatprep.subr.mxu0 0.0
  %81 = vmatpush1.msra.mxu0 0.0
  %82 = vmatprep.subr.mxu0 0.0
  %83 = vmatpush1.msra.mxu0 0.0
  %84 = vmatprep.subr.mxu0 0.0
  %85 = vmatpush1.msra.mxu0 0.0
  %86 = vmatprep.subr.mxu0 0.0
  %87 = vmatpush1.msra.mxu0 0.0
  %88 = vmatprep.subr.mxu0 0.0
  %89 = vmatpush1.msra.mxu0 0.0
  %90 = vmatprep.subr.mxu0 0.0
  %91 = vmatpush1.msra.mxu0 0.0
  %92 = vmatprep.subr.mxu0 0.0
  %93 = vmatpush1.msra.mxu0 0.0
  %94 = vmatprep.subr.mxu0 0.0
  %95 = vmatpush1.msra.mxu0 0.0
  %96 = vmatprep.subr.mxu0 0.0
  %97 = vmatpush1.msra.mxu0 0.0
  %98 = vmatprep.subr.mxu0 0.0
  %99 = vmatpush1.msra.mxu0 0.0
  %100 = vmatprep.subr.mxu0 0.0
  %101 = vmatpush1.msra.mxu0 0.0
  %102 = vmatprep.subr.mxu0 0.0
  %103 = vmatpush1.msra.mxu0 0.0
  %104 = vmatprep.subr.mxu0 0.0
  %105 = vmatpush1.msra.mxu0 0.0
  %106 = vmatprep.subr.mxu0 0.0
  %107 = vmatpush1.msra.mxu0 0.0
  %108 = vmatprep.subr.mxu0 0.0
  %109 = vmatpush1.msra.mxu0 0.0
  %110 = vmatprep.subr.mxu0 0.0
  %111 = vmatpush1.msra.mxu0 0.0
  %112 = vmatprep.subr.mxu0 0.0
  %113 = vmatpush1.msra.mxu0 0.0
  %114 = vmatprep.subr.mxu0 0.0
  %115 = vmatpush1.msra.mxu0 0.0
  %116 = vmatprep.mubr.f32.mxu0 0.0
  %117 = vmatmul.mubr.f32.gmra.mrb[0].mxu0 %v35
  %v118 = vpop.f32.mrb[0].mxu0
  %v119 = vadd.f32 0.0, %v118
  %v120 = vpop.f32.mrb[0].mxu0
  %121 = vmatprep.mubr.f32.mxu0 0.0
  %122 = vmatmul.mubr.f32.gmra.mrb[0].mxu0 %v38
  %v123 = vpop.f32.mrb[0].mxu0
  %v124 = vadd.f32 0.0, %v123
  %v125 = vpop.f32.mrb[0].mxu0
  %126 = vmatprep.mubr.f32.mxu0 0.0
  %127 = vmatmul.mubr.f32.gmra.mrb[0].mxu0 %v41
  %v128 = vpop.f32.mrb[0].mxu0
  %v129 = vadd.f32 0.0, %v128
  %v130 = vpop.f32.mrb[0].mxu0
  %131 = vmatprep.mubr.f32.mxu0 0.0
  %132 = vmatmul.mubr.f32.gmra.mrb[0].mxu0 %v44
  %v133 = vpop.f32.mrb[0].mxu0
  %v134 = vadd.f32 0.0, %v133
  %v135 = vpop.f32.mrb[0].mxu0
  %136 = vmatprep.mubr.f32.mxu0 0.0
  %137 = vmatmul.mubr.f32.gmra.mrb[0].mxu0 %v47
  %v138 = vpop.f32.mrb[0].mxu0
  %v139 = vadd.f32 0.0, %v138
  %v140 = vpop.f32.mrb[0].mxu0
  %141 = vmatprep.mubr.f32.mxu0 0.0
  %142 = vmatmul.mubr.f32.gmra.mrb[0].mxu0 %v50
  %v143 = vpop.f32.mrb[0].mxu0
  %v144 = vadd.f32 0.0, %v143
  %v145 = vpop.f32.mrb[0].mxu0
  %146 = vdwg.mxu0
  %v147 = vmul.f32 %v119, %v119
  %v148 = vmul.f32 %v124, %v124
  %v149 = vmul.f32 %v129, %v129
  %v150 = vmul.f32 %v134, %v134
  %v151 = vmul.f32 %v139, %v139
  %v152 = vmul.f32 %v144, %v144
  %v153 = vadd.f32 %v147, %v149
  %v154 = vadd.f32 %v148, %v150
  %v155 = vadd.f32 %v153, %v151
  %v156 = vadd.f32 %v154, %v152
  %v157 = vmul.f32 %v155, 0.8
  %v158 = vmul.f32 %v156, 0.8
  %v159 = vadd.f32 %v157, 4e-09
  %v160 = vadd.f32 %v158, 4e-09
  %v161 = vld [vmem:[%s2] sm:$0xff]
  %v162 = vld [vmem:[%s3] sm:$0xff]
  %164 = vset.pattern.permute.xlu0 0
  %165 = vperm.xlu0 %164, %v162
  %v166 = vpop.permute.xlu0 %165
  %vm168 = vcmask 130048
  %v170 = vsel %vm168, %v161, 0
  %172 = vmatprep.subr.mxu0 0.0
  %173 = vmatpush1.msra.mxu0 %v159
  %174 = vmatprep.subr.mxu0 0.0
  %175 = vmatpush1.msra.mxu0 %v160
  %176 = vmatprep.subr.mxu0 0.0
  %177 = vmatpush1.msra.mxu0 0.0
  %178 = vmatprep.subr.mxu0 0.0
  %179 = vmatpush1.msra.mxu0 0.0
  %180 = vmatprep.subr.mxu0 0.0
  %181 = vmatpush1.msra.mxu0 0.0
  %182 = vmatprep.subr.mxu0 0.0
  %183 = vmatpush1.msra.mxu0 0.0
  %184 = vmatprep.subr.mxu0 0.0
  %185 = vmatpush1.msra.mxu0 0.0
  %186 = vmatprep.subr.mxu0 0.0
  %187 = vmatpush1.msra.mxu0 0.0
  %188 = vmatprep.subr.mxu0 0.0
  %189 = vmatpush1.msra.mxu0 0.0
  %190 = vmatprep.subr.mxu0 0.0
  %191 = vmatpush1.msra.mxu0 0.0
  %192 = vmatprep.subr.mxu0 0.0
  %193 = vmatpush1.msra.mxu0 0.0
  %194 = vmatprep.subr.mxu0 0.0
  %195 = vmatpush1.msra.mxu0 0.0
  %196 = vmatprep.subr.mxu0 0.0
  %197 = vmatpush1.msra.mxu0 0.0
  %198 = vmatprep.subr.mxu0 0.0
  %199 = vmatpush1.msra.mxu0 0.0
  %200 = vmatprep.subr.mxu0 0.0
  %201 = vmatpush1.msra.mxu0 0.0
  %202 = vmatprep.subr.mxu0 0.0
  %203 = vmatpush1.msra.mxu0 0.0
  %204 = vmatprep.subr.mxu0 0.0
  %205 = vmatpush1.msra.mxu0 0.0
  %206 = vmatprep.subr.mxu0 0.0
  %207 = vmatpush1.msra.mxu0 0.0
  %208 = vmatprep.subr.mxu0 0.0
  %209 = vmatpush1.msra.mxu0 0.0
  %210 = vmatprep.subr.mxu0 0.0
  %211 = vmatpush1.msra.mxu0 0.0
  %212 = vmatprep.subr.mxu0 0.0
  %213 = vmatpush1.msra.mxu0 0.0
  %214 = vmatprep.subr.mxu0 0.0
  %215 = vmatpush1.msra.mxu0 0.0
  %216 = vmatprep.subr.mxu0 0.0
  %217 = vmatpush1.msra.mxu0 0.0
  %218 = vmatprep.subr.mxu0 0.0
  %219 = vmatpush1.msra.mxu0 0.0
  %220 = vmatprep.subr.mxu0 0.0
  %221 = vmatpush1.msra.mxu0 0.0
  %222 = vmatprep.subr.mxu0 0.0
  %223 = vmatpush1.msra.mxu0 0.0
  %224 = vmatprep.subr.mxu0 0.0
  %225 = vmatpush1.msra.mxu0 0.0
  %226 = vmatprep.subr.mxu0 0.0
  %227 = vmatpush1.msra.mxu0 0.0
  %228 = vmatprep.subr.mxu0 0.0
  %229 = vmatpush1.msra.mxu0 0.0
  %230 = vmatprep.subr.mxu0 0.0
  %231 = vmatpush1.msra.mxu0 0.0
  %232 = vmatprep.subr.mxu0 0.0
  %233 = vmatpush1.msra.mxu0 0.0
  %234 = vmatprep.subr.mxu0 0.0
  %235 = vmatpush1.msra.mxu0 0.0
  %236 = vmatprep.mubr.f32.mxu0 0.0
  %237 = vmatmul.mubr.f32.gmra.mrb[0].mxu0 %v170
  %v238 = vpop.f32.mrb[0].mxu0
  %v239 = vadd.f32 %v166, %v238
  %v240 = vpop.f32.mrb[0].mxu0
  %241 = vdwg.mxu0
  %v242 = vmax.f32 %v239, 0.0
  %v243 = vld [vmem:[%s4] sm:$0xff]
  %v244 = vld [vmem:[%s5] sm:$0xff]
  %246 = vset.pattern.permute.xlu0 0
  %247 = vperm.xlu0 %246, %v244
  %v248 = vpop.permute.xlu0 %247
  %vm250 = vcmask 64512
  %v252 = vsel %vm250, %v243, 0
  %254 = vmatprep.subr.mxu0 0.0
  %255 = vmatpush1.msra.mxu0 %v242
  %256 = vmatprep.subr.mxu0 0.0
  %257 = vmatpush1.msra.mxu0 0.0
  %258 = vmatprep.subr.mxu0 0.0
  %259 = vmatpush1.msra.mxu0 0.0
  %260 = vmatprep.subr.mxu0 0.0
  %261 = vmatpush1.msra.mxu0 0.0
  %262 = vmatprep.subr.mxu0 0.0
  %263 = vmatpush1.msra.mxu0 0.0
  %264 = vmatprep.subr.mxu0 0.0
  %265 = vmatpush1.msra.mxu0 0.0
  %266 = vmatprep.subr.mxu0 0.0
  %267 = vmatpush1.msra.mxu0 0.0
  %268 = vmatprep.subr.mxu0 0.0
  %269 = vmatpush1.msra.mxu0 0.0
  %270 = vmatprep.subr.mxu0 0.0
  %271 = vmatpush1.msra.mxu0 0.0
  %272 = vmatprep.subr.mxu0 0.0
  %273 = vmatpush1.msra.mxu0 0.0
  %274 = vmatprep.subr.mxu0 0.0
  %275 = vmatpush1.msra.mxu0 0.0
  %276 = vmatprep.subr.mxu0 0.0
  %277 = vmatpush1.msra.mxu0 0.0
  %278 = vmatprep.subr.mxu0 0.0
  %279 = vmatpush1.msra.mxu0 0.0
  %280 = vmatprep.subr.mxu0 0.0
  %281 = vmatpush1.msra.mxu0 0.0
  %282 = vmatprep.subr.mxu0 0.0
  %283 = vmatpush1.msra.mxu0 0.0
  %284 = vmatprep.subr.mxu0 0.0
  %285 = vmatpush1.msra.mxu0 0.0
  %286 = vmatprep.subr.mxu0 0.0
  %287 = vmatpush1.msra.mxu0 0.0
  %288 = vmatprep.subr.mxu0 0.0
  %289 = vmatpush1.msra.mxu0 0.0
  %290 = vmatprep.subr.mxu0 0.0
  %291 = vmatpush1.msra.mxu0 0.0
  %292 = vmatprep.subr.mxu0 0.0
  %293 = vmatpush1.msra.mxu0 0.0
  %294 = vmatprep.subr.mxu0 0.0
  %295 = vmatpush1.msra.mxu0 0.0
  %296 = vmatprep.subr.mxu0 0.0
  %297 = vmatpush1.msra.mxu0 0.0
  %298 = vmatprep.subr.mxu0 0.0
  %299 = vmatpush1.msra.mxu0 0.0
  %300 = vmatprep.subr.mxu0 0.0
  %301 = vmatpush1.msra.mxu0 0.0
  %302 = vmatprep.subr.mxu0 0.0
  %303 = vmatpush1.msra.mxu0 0.0
  %304 = vmatprep.subr.mxu0 0.0
  %305 = vmatpush1.msra.mxu0 0.0
  %306 = vmatprep.subr.mxu0 0.0
  %307 = vmatpush1.msra.mxu0 0.0
  %308 = vmatprep.subr.mxu0 0.0
  %309 = vmatpush1.msra.mxu0 0.0
  %310 = vmatprep.subr.mxu0 0.0
  %311 = vmatpush1.msra.mxu0 0.0
  %312 = vmatprep.subr.mxu0 0.0
  %313 = vmatpush1.msra.mxu0 0.0
  %314 = vmatprep.subr.mxu0 0.0
  %315 = vmatpush1.msra.mxu0 0.0
  %316 = vmatprep.subr.mxu0 0.0
  %317 = vmatpush1.msra.mxu0 0.0
  %318 = vmatprep.mubr.f32.mxu0 0.0
  %319 = vmatmul.mubr.f32.gmra.mrb[0].mxu0 %v252
  %v320 = vpop.f32.mrb[0].mxu0
  %v321 = vadd.f32 %v248, %v320
  %v322 = vpop.f32.mrb[0].mxu0
  %323 = vdwg.mxu0
  %vm324 = vcmask 15360
  %325 = vst.msk [vmem:[%s6] sm:$0xff] %vm324, %v159
  %326 = vst.msk [vmem:[%s6 + $0x8] sm:$0xff] %vm324, %v160
  %327 = vst.msk [vmem:[%s6 + $0x10] sm:$0xff] %vm324, %v321
  // Predicated region
  $region26: #{tpu_custom_call.1} parent=0 // pred_check
    _
  $region27: #{tpu_custom_call.1} parent=0 // pred_check_branch
    %329 = sbr.rel (0) target = $region29
  $region28: #{tpu_custom_call.1} parent=0 // pred_region
    _
  $region29: #{tpu_custom_call.1} parent=0 // pred_fallthru
    _
  // Predicated region
  $region30: #{tpu_custom_call.1} parent=0 // pred_check
    _
  $region31: #{tpu_custom_call.1} parent=0 // pred_check_branch
    %331 = sbr.rel (0) target = $region33
  $region32: #{tpu_custom_call.1} parent=0 // pred_region
    _
  $region33: #{tpu_custom_call.1} parent=0 // pred_fallthru
    _

</llo_original>
